<compile_context>
chip_gen: v7x
topology: tpu7x:2x2x1
jax: 0.10.0
libtpu: 0.0.40
codegen_flags: <defaults>
</compile_context>

<pallas_src>
import jax
import jax.numpy as jnp
from jax.experimental import pallas as pl
from jax.experimental.pallas import tpu as pltpu


def _round_up(x, m):
    return ((x + m - 1) // m) * m


def _cdiv(a, b):
    return -(-a // b)


def _hw_config():
    """Generation-aware VMEM budget + default operand dtype."""
    gen = None
    try:
        kind = jax.devices()[0].device_kind.lower()
        for g in (7, 6, 5, 4):
            if f"v{g}" in kind:
                gen = g
                break
    except Exception:
        gen = None

    if gen is not None and gen >= 7:
        vmem_physical = 64 << 20           # v7x: 64 MiB per TensorCore
    elif gen is not None:
        vmem_physical = 128 << 20          # v4 / v5e / v6e: 128 MiB
    else:
        try:
            vmem_physical = int(pltpu.get_tpu_info().vmem_capacity_bytes)
        except Exception:
            vmem_physical = 64 << 20       # conservative fallback

    vmem_target = int(vmem_physical * 0.78)   # ~50 MiB on v7x, ~100 MiB on v5e/v6e
    vmem_cap = int(vmem_physical * 0.87)      # hard cap handed to Mosaic
    # bf16 operands halve weight DMA bytes and double MXU throughput on the
    # 2x256^2 MXUs; elementwise math + accumulation stays f32 in-kernel.
    compute_dtype = jnp.bfloat16 if (gen is not None and gen >= 6) else None
    return gen, vmem_target, vmem_cap, compute_dtype


def _vmem_estimate(tm, th, d_pad, w_bytes, out_bytes):
    """Rough VMEM footprint of one grid step (double-buffered in/out tiles)."""
    return (
        2 * tm * d_pad * w_bytes           # x tile
        + 2 * d_pad * 2 * th * w_bytes     # fused W1|W2 tile
        + 2 * th * d_pad * w_bytes         # W3 tile
        + 2 * tm * d_pad * out_bytes       # output tile
        + tm * d_pad * 4                   # f32 accumulator scratch
        + 3 * tm * 2 * th * 4              # hg / gate / gated temporaries
        + (2 * 2 * th + 2 * d_pad) * 4     # biases
    )


def glu_ffn_kernel(x_ref, w12_ref, b12_ref, w3_ref, b3_ref, o_ref, acc_ref):
    h_idx = pl.program_id(1)

    x = x_ref[...]
    # Fused value+gate projection: one (tm, D) x (D, 2*th) MXU matmul, f32 acc.
    hg = jnp.dot(x, w12_ref[...], preferred_element_type=jnp.float32) + b12_ref[...]
    th = hg.shape[1] // 2
    h_proj = hg[:, :th]                        # fc1 slice of this hidden tile
    gate = jax.nn.sigmoid(hg[:, th:])          # fc2 slice -> EUP, f32 elementwise
    gated = (h_proj * gate).astype(w3_ref.dtype)
    # Partial fc3 contribution of this hidden tile.
    partial = jnp.dot(gated, w3_ref[...], preferred_element_type=jnp.float32)

    @pl.when(h_idx == 0)
    def _():
        # First reduction step: write directly (and fold b3 in exactly once);
        # avoids a full tm x D zero store + reload per row tile.
        acc_ref[...] = partial + b3_ref[...]

    @pl.when(h_idx > 0)
    def _():
        acc_ref[...] += partial

    @pl.when(h_idx == pl.num_programs(1) - 1)
    def _():
        o_ref[...] = acc_ref[...].astype(o_ref.dtype)
    # TODO(synk): training-mode dropout needs in-kernel RNG; inference dropout is identity.


def prepare_params(w1, b1, w2, b2, w3, b3, *, tm=None, th=None, compute_dtype="auto"):
    """One-time weight preparation: pad, interleave W1|W2 per hidden tile, cast.

    This performs a full HBM pass over the weights, so call it ONCE (at model
    load time), not per forward call.  Weights are stored (in_features,
    out_features), i.e. transposed relative to torch.nn.Linear.weight.
    """
    D, H = w1.shape
    gen, vmem_target, vmem_cap, auto_dtype = _hw_config()
    if compute_dtype == "auto":
        compute_dtype = auto_dtype

    D_pad = _round_up(D, 128)
    H_lane = _round_up(H, 128)
    w_bytes = (jnp.dtype(compute_dtype).itemsize if compute_dtype is not None
               else jnp.dtype(w1.dtype).itemsize)

    # ---- Auto-derive (tm, th) from the per-generation VMEM target. ----
    tm_eff = _round_up(tm if tm is not None
                       else (256 if (gen is not None and gen >= 6) else 128), 8)
    if th is None:
        th = 1024 if vmem_target >= (96 << 20) else 512
    th_eff = max(128, min(_round_up(th, 128), H_lane))
    # Enforce the budget: shrink th first (weight tiles dominate), then tm.
    while _vmem_estimate(tm_eff, th_eff, D_pad, w_bytes, 4) > vmem_target:
        if th_eff > 128:
            th_eff -= 128
        elif tm_eff > 8:
            tm_eff = max(8, (tm_eff // 2) // 8 * 8)
        else:
            break

    H_pad = _round_up(H, th_eff)
    nh = H_pad // th_eff

    if compute_dtype is not None:
        w1, w2, w3 = (w.astype(compute_dtype) for w in (w1, w2, w3))
    # Biases take part in f32 elementwise math regardless of operand dtype.
    b1, b2, b3 = (b.astype(jnp.float32) for b in (b1, b2, b3))

    w1_p = jnp.pad(w1, ((0, D_pad - D), (0, H_pad - H)))
    w2_p = jnp.pad(w2, ((0, D_pad - D), (0, H_pad - H)))
    b1_p = jnp.pad(b1, ((0, 0), (0, H_pad - H)))
    b2_p = jnp.pad(b2, ((0, 0), (0, H_pad - H)))
    w3_p = jnp.pad(w3, ((0, H_pad - H), (0, D_pad - D)))
    b3_p = jnp.pad(b3, ((0, 0), (0, D_pad - D)))

    # Interleave W1|W2 (and b1|b2) per hidden tile: block h of w12 holds
    # [W1[:, h-tile] | W2[:, h-tile]] so the kernel does one (D, 2*th) matmul.
    w12 = jnp.concatenate(
        [w1_p.reshape(D_pad, nh, th_eff), w2_p.reshape(D_pad, nh, th_eff)], axis=2
    ).reshape(D_pad, 2 * H_pad)
    b12 = jnp.concatenate(
        [b1_p.reshape(1, nh, th_eff), b2_p.reshape(1, nh, th_eff)], axis=2
    ).reshape(1, 2 * H_pad)

    jax.block_until_ready((w12, b12, w3_p, b3_p))   # materialize once, up front
    return dict(
        w12=w12, b12=b12, w3=w3_p, b3=b3_p,
        dim=D, hidden=H, d_pad=D_pad, h_pad=H_pad, th=th_eff, nh=nh, tm=tm_eff,
        compute_dtype=compute_dtype, gen=gen, vmem_cap=vmem_cap,
    )


def glu_feedforward(x, prep):
    """GLU FFN: (x@W1+b1) * sigmoid(x@W2+b2) @ W3 + b3  (dropout = identity)."""
    M, D = x.shape
    assert D == prep["dim"], (D, prep["dim"])
    out_dtype = x.dtype
    cd = prep["compute_dtype"]
    if cd is not None:
        x = x.astype(cd)

    D_pad, H_pad, th, nh = prep["d_pad"], prep["h_pad"], prep["th"], prep["nh"]
    w12, b12, w3_p, b3_p = prep["w12"], prep["b12"], prep["w3"], prep["b3"]

    # Row tile: as large as the prepared VMEM budget allows, clamped for small
    # M; on v7x keep >= 2 row tiles when M permits so both TensorCores work.
    tm = min(prep["tm"], _round_up(M, 8))
    if prep["gen"] == 7 and M > 8:
        tm = min(tm, _round_up(_cdiv(M, 2), 8))
    M_pad = _round_up(M, tm)
    n_row_tiles = M_pad // tm

    x_p = jnp.pad(x, ((0, M_pad - M), (0, D_pad - D)))
    grid = (n_row_tiles, nh)

    w_bytes = x_p.dtype.itemsize
    out_bytes = jnp.dtype(out_dtype).itemsize
    est = _vmem_estimate(tm, th, D_pad, w_bytes, out_bytes)
    vmem_limit = max(16 << 20, min(int(est * 1.25) + (2 << 20), prep["vmem_cap"]))

    # Weights are re-streamed once per row tile -> scale their bytes by tiles.
    cost = pl.CostEstimate(
        flops=2 * M_pad * D_pad * (2 * H_pad) + 2 * M_pad * H_pad * D_pad,
        transcendentals=M_pad * H_pad,
        bytes_accessed=int(
            x_p.size * w_bytes
            + n_row_tiles * (w12.size * w12.dtype.itemsize
                             + w3_p.size * w3_p.dtype.itemsize
                             + b12.size * 4 + b3_p.size * 4)
            + M_pad * D_pad * out_bytes
        ),
    )

    out_p = pl.pallas_call(
        glu_ffn_kernel,
        out_shape=jax.ShapeDtypeStruct((M_pad, D_pad), out_dtype),
        grid_spec=pltpu.PrefetchScalarGridSpec(
            num_scalar_prefetch=0,
            grid=grid,
            in_specs=[
                pl.BlockSpec((tm, D_pad), lambda i, h: (i, 0)),        # x tile
                pl.BlockSpec((D_pad, 2 * th), lambda i, h: (0, h)),    # fused W1|W2 tile
                pl.BlockSpec((1, 2 * th), lambda i, h: (0, h)),        # fused b1|b2 tile
                pl.BlockSpec((th, D_pad), lambda i, h: (h, 0)),        # W3 tile
                pl.BlockSpec((1, D_pad), lambda i, h: (0, 0)),         # b3
            ],
            out_specs=pl.BlockSpec((tm, D_pad), lambda i, h: (i, 0)),
            scratch_shapes=[pltpu.VMEM((tm, D_pad), jnp.float32)],
        ),
        compiler_params=pltpu.CompilerParams(
            dimension_semantics=("parallel", "arbitrary"),
            vmem_limit_bytes=vmem_limit,
        ),
        cost_estimate=cost,
        # If profiling shows exposed DMA on the hidden axis, consider
        # pipeline_mode=pl.Buffered(3) on the w12/w3 specs (sweep 2 vs 3).
    )(x_p, w12, b12, w3_p, b3_p)

    return out_p[:M, :D]


def init_params(key, dim, ff_mult=4, dtype=jnp.float32):
    """Deterministic init mimicking nn.Linear shapes (stored transposed)."""
    hidden = ff_mult * dim
    ks = jax.random.split(key, 6)
    s1 = 1.0 / jnp.sqrt(dim)
    s3 = 1.0 / jnp.sqrt(hidden)
    w1 = jax.random.uniform(ks[0], (dim, hidden), dtype, -s1, s1)
    b1 = jax.random.uniform(ks[1], (1, hidden), dtype, -s1, s1)
    w2 = jax.random.uniform(ks[2], (dim, hidden), dtype, -s1, s1)
    b2 = jax.random.uniform(ks[3], (1, hidden), dtype, -s1, s1)
    w3 = jax.random.uniform(ks[4], (hidden, dim), dtype, -s3, s3)
    b3 = jax.random.uniform(ks[5], (1, dim), dtype, -s3, s3)
    return w1, b1, w2, b2, w3, b3


def reference(x, w1, b1, w2, b2, w3, b3):
    h = x @ w1 + b1
    g = jax.nn.sigmoid(x @ w2 + b2)
    return (h * g) @ w3 + b3


if __name__ == "__main__":
    key = jax.random.PRNGKey(0)
    dim, ff_mult = 32, 4
    batch, seq = 2, 8

    kx, kp = jax.random.split(key)
    x = jax.random.normal(kx, (batch, seq, dim), jnp.float32)
    params = init_params(kp, dim, ff_mult)

    # One-time weight prep (pad / fuse / cast) — NOT in the per-call path.
    prep = prepare_params(*params)

    # Flatten (batch, seq, dim) -> (M, dim) for the kernel; reshape back after.
    x2d = x.reshape(batch * seq, dim)
    out2d = glu_feedforward(x2d, prep)
    out = out2d.reshape(batch, seq, dim)
    jax.block_until_ready(out)

    ref = reference(x2d, *params).reshape(batch, seq, dim)
    assert out.shape == (batch, seq, dim)
    if prep["compute_dtype"] is None:
        atol = rtol = 1e-5       # pure f32 path (v5e / unknown)
    else:
        atol = rtol = 5e-2       # bf16 operands, f32 accumulation (v6e / v7x)
    err = float(jnp.max(jnp.abs(out - ref)))
    assert jnp.allclose(out, ref, atol=atol, rtol=rtol), err
    print("KERNEL_OK")
</pallas_src>

<mosaic_0001>
module attributes {stable_mosaic.version = 11 : i64} {
  func.func @glu_ffn_kernel(%arg0: i32, %arg1: i32, %arg2: memref<16x128xf32, #tpu.memory_space<vmem>>, %arg3: memref<128x256xf32, #tpu.memory_space<vmem>>, %arg4: memref<1x256xf32, #tpu.memory_space<vmem>>, %arg5: memref<128x128xf32, #tpu.memory_space<vmem>>, %arg6: memref<1x128xf32, #tpu.memory_space<vmem>>, %arg7: memref<16x128xf32, #tpu.memory_space<vmem>>, %arg8: memref<16x128xf32, #tpu.memory_space<vmem>>) attributes {dimension_semantics = [#tpu.dimension_semantics<parallel>, #tpu.dimension_semantics<arbitrary>], iteration_bounds = array<i64: 1, 1>, scalar_prefetch = 0 : i64, scratch_operands = 1 : i64, tpu.core_type = #tpu.core_type<tc>, window_params = [{transform_indices = @transform_0, window_bounds = array<i64: 16, 128>}, {transform_indices = @transform_1, window_bounds = array<i64: 128, 256>}, {transform_indices = @transform_2, window_bounds = array<i64: 1, 256>}, {transform_indices = @transform_3, window_bounds = array<i64: 128, 128>}, {pipeline_mode = #tpu.pipeline_mode<synchronous>, transform_indices = @transform_4, window_bounds = array<i64: 1, 128>}, {transform_indices = @transform_5, window_bounds = array<i64: 16, 128>}]} {
    %c0 = arith.constant 0 : index
    %c0_0 = arith.constant 0 : index
    %0 = vector.load %arg2[%c0, %c0_0] : memref<16x128xf32, #tpu.memory_space<vmem>>, vector<16x128xf32>
    %c0_1 = arith.constant 0 : index
    %c0_2 = arith.constant 0 : index
    %1 = vector.load %arg3[%c0_1, %c0_2] : memref<128x256xf32, #tpu.memory_space<vmem>>, vector<128x256xf32>
    %cst = arith.constant dense<0.000000e+00> : vector<16x256xf32>
    %2 = tpu.matmul %0, %1, %cst {dimension_numbers = #tpu.dot_dimension_numbers<[1], [0], [0], [1], [0, 0, 1, 1], [], []>} : vector<16x128xf32>, vector<128x256xf32>, vector<16x256xf32> -> vector<16x256xf32>
    %c0_3 = arith.constant 0 : index
    %c0_4 = arith.constant 0 : index
    %3 = vector.load %arg4[%c0_3, %c0_4] : memref<1x256xf32, #tpu.memory_space<vmem>>, vector<1x256xf32>
    %4 = vector.broadcast %3 : vector<1x256xf32> to vector<16x256xf32>
    %5 = arith.addf %2, %4 : vector<16x256xf32>
    %6 = vector.extract_strided_slice %5 {offsets = [0, 0], sizes = [16, 128], strides = [1, 1]} : vector<16x256xf32> to vector<16x128xf32>
    %7 = vector.extract_strided_slice %5 {offsets = [0, 128], sizes = [16, 128], strides = [1, 1]} : vector<16x256xf32> to vector<16x128xf32>
    %8 = arith.negf %7 : vector<16x128xf32>
    %9 = math.exp %8 : vector<16x128xf32>
    %cst_5 = arith.constant 1.000000e+00 : f32
    %10 = vector.broadcast %cst_5 : f32 to vector<16x128xf32>
    %11 = arith.addf %10, %9 : vector<16x128xf32>
    %12 = arith.divf %10, %11 : vector<16x128xf32>
    %13 = arith.mulf %6, %12 : vector<16x128xf32>
    %c0_6 = arith.constant 0 : index
    %c0_7 = arith.constant 0 : index
    %14 = vector.load %arg5[%c0_6, %c0_7] : memref<128x128xf32, #tpu.memory_space<vmem>>, vector<128x128xf32>
    %cst_8 = arith.constant dense<0.000000e+00> : vector<16x128xf32>
    %15 = tpu.matmul %13, %14, %cst_8 {dimension_numbers = #tpu.dot_dimension_numbers<[1], [0], [0], [1], [0, 0, 1, 1], [], []>} : vector<16x128xf32>, vector<128x128xf32>, vector<16x128xf32> -> vector<16x128xf32>
    %c0_i32 = arith.constant 0 : i32
    %16 = arith.cmpi eq, %arg1, %c0_i32 : i32
    %17 = arith.extui %16 : i1 to i32
    %c0_i32_9 = arith.constant 0 : i32
    %18 = arith.cmpi ne, %17, %c0_i32_9 : i32
    scf.if %18 {
      %c0_14 = arith.constant 0 : index
      %c0_15 = arith.constant 0 : index
      %25 = vector.load %arg6[%c0_14, %c0_15] : memref<1x128xf32, #tpu.memory_space<vmem>>, vector<1x128xf32>
      %26 = vector.broadcast %25 : vector<1x128xf32> to vector<16x128xf32>
      %27 = arith.addf %15, %26 : vector<16x128xf32>
      %c0_16 = arith.constant 0 : index
      %c0_17 = arith.constant 0 : index
      %28 = vector.load %arg8[%c0_16, %c0_17] : memref<16x128xf32, #tpu.memory_space<vmem>>, vector<16x128xf32>
      tpu.vector_store %arg8[%c0_16, %c0_17], %27 {strides = array<i32>} : memref<16x128xf32, #tpu.memory_space<vmem>>, vector<16x128xf32>,
    } else {
    }
    %c0_i32_10 = arith.constant 0 : i32
    %19 = arith.cmpi sgt, %arg1, %c0_i32_10 : i32
    %20 = arith.extui %19 : i1 to i32
    %c0_i32_11 = arith.constant 0 : i32
    %21 = arith.cmpi ne, %20, %c0_i32_11 : i32
    scf.if %21 {
      %c0_14 = arith.constant 0 : index
      %c0_15 = arith.constant 0 : index
      %25 = vector.load %arg8[%c0_14, %c0_15] : memref<16x128xf32, #tpu.memory_space<vmem>>, vector<16x128xf32>
      %26 = arith.addf %25, %15 : vector<16x128xf32>
      %c0_16 = arith.constant 0 : index
      %c0_17 = arith.constant 0 : index
      %27 = vector.load %arg8[%c0_16, %c0_17] : memref<16x128xf32, #tpu.memory_space<vmem>>, vector<16x128xf32>
      tpu.vector_store %arg8[%c0_16, %c0_17], %26 {strides = array<i32>} : memref<16x128xf32, #tpu.memory_space<vmem>>, vector<16x128xf32>,
    } else {
    }
    %c0_i32_12 = arith.constant 0 : i32
    %22 = arith.cmpi eq, %arg1, %c0_i32_12 : i32
    %23 = arith.extui %22 : i1 to i32
    %c0_i32_13 = arith.constant 0 : i32
    %24 = arith.cmpi ne, %23, %c0_i32_13 : i32
    scf.if %24 {
      %c0_14 = arith.constant 0 : index
      %c0_15 = arith.constant 0 : index
      %25 = vector.load %arg8[%c0_14, %c0_15] : memref<16x128xf32, #tpu.memory_space<vmem>>, vector<16x128xf32>
      %c0_16 = arith.constant 0 : index
      %c0_17 = arith.constant 0 : index
      %26 = vector.load %arg7[%c0_16, %c0_17] : memref<16x128xf32, #tpu.memory_space<vmem>>, vector<16x128xf32>
      tpu.vector_store %arg7[%c0_16, %c0_17], %25 {strides = array<i32>} : memref<16x128xf32, #tpu.memory_space<vmem>>, vector<16x128xf32>,
    } else {
    }
    return
  }
  func.func @transform_0(%arg0: i32, %arg1: i32) -> (i32, i32) {
    %c0_i32 = arith.constant 0 : i32
    %c0_i32_0 = arith.constant 0 : i32
    return %arg0, %c0_i32 : i32, i32
  }
  func.func @transform_1(%arg0: i32, %arg1: i32) -> (i32, i32) {
    %c0_i32 = arith.constant 0 : i32
    %c0_i32_0 = arith.constant 0 : i32
    return %c0_i32, %arg1 : i32, i32
  }
  func.func @transform_2(%arg0: i32, %arg1: i32) -> (i32, i32) {
    %c0_i32 = arith.constant 0 : i32
    %c0_i32_0 = arith.constant 0 : i32
    return %c0_i32, %arg1 : i32, i32
  }
  func.func @transform_3(%arg0: i32, %arg1: i32) -> (i32, i32) {
    %c0_i32 = arith.constant 0 : i32
    %c0_i32_0 = arith.constant 0 : i32
    return %arg1, %c0_i32 : i32, i32
  }
  func.func @transform_4(%arg0: i32, %arg1: i32) -> (i32, i32) {
    %c0_i32 = arith.constant 0 : i32
    %c0_i32_0 = arith.constant 0 : i32
    %c0_i32_1 = arith.constant 0 : i32
    return %c0_i32, %c0_i32_0 : i32, i32
  }
  func.func @transform_5(%arg0: i32, %arg1: i32) -> (i32, i32) {
    %c0_i32 = arith.constant 0 : i32
    %c0_i32_0 = arith.constant 0 : i32
    return %arg0, %c0_i32 : i32, i32
  }
}

</mosaic_0001>

<llo_original>
// kernel: tpu_custom_call.1
$region0: #{tpu_custom_call.1}
  #allocation0 [shape = 'u32[]', space=smem, size = 0x4, offset = 0x4, fixed_abs, tag = 'smem constant byte address 0x4 - core index']
  #allocation1 [shape = 'u32[144,128]{1,0:T(1,128)}', space=vmem, size = 0x12000, scoped, tag = 'internal scratch']
  #allocation2 [shape = 'f32[16,128]{1,0:T(8,128)}', space=vmem, size = 0x2000, scoped, tag = 'scratch operand']
  %s0 = inlined_call_operand.hbm [shape: f32[16,128], index: 0, kind: input, shape index: {}]
  %s1 = inlined_call_operand.hbm [shape: f32[128,256], index: 1, kind: input, shape index: {}]
  %s2 = inlined_call_operand.vmem [shape: f32[1,256], index: 2, kind: input, shape index: {}]
  %s3 = inlined_call_operand.hbm [shape: f32[128,128], index: 3, kind: input, shape index: {}]
  %s4 = inlined_call_operand.vmem [shape: f32[1,128], index: 4, kind: input, shape index: {}]
  %s5 = inlined_call_operand.hbm [shape: f32[16,128], index: 5, kind: output, shape index: {}]
  %s6 = sld [smem:[#allocation0]]
  $region54: #{tpu_custom_call.1} parent=0
    _
  %s8 = ssub.s32 1, %s6
  %s9 = scalar_select 0, %s8, %s6
  $region1: #{tpu_custom_call.1} parent=0
    #allocation3 [shape = 'u8[8192]{0}', space=vmem, size = 0x2000, scoped, tag = 'input window, operand 0, single buffered']
    #allocation4 [shape = 's32[1]{0}', space=sflag, size = 0x4, scoped, tag = 'scoped memory for tpu_custom_call.1']
    #allocation5 [shape = 's32[1]{0}', space=sflag, size = 0x4, scoped, tag = 'scoped memory for tpu_custom_call.1']
    #allocation6 [shape = 'u8[131072]{0}', space=vmem, size = 0x20000, scoped, tag = 'input window, operand 1, single buffered']
    #allocation7 [shape = 's32[1]{0}', space=sflag, size = 0x4, scoped, tag = 'scoped memory for tpu_custom_call.1']
    #allocation8 [shape = 'u8[65536]{0}', space=vmem, size = 0x10000, scoped, tag = 'input window, operand 3, single buffered']
    #allocation9 [shape = 'u8[8192]{0}', space=vmem, size = 0x2000, scoped, tag = 'output window, operand 0, single buffered']
    %10 = vsyncpa [#allocation4], 0
    %11 = vsyncpa [#allocation7], 0
    %12 = vsyncpa [#allocation5], 0
    // Predicated region
    $region2: #{tpu_custom_call.1} parent=1 // pred_check
      _
    $region3: #{tpu_custom_call.1} parent=1 // pred_check_branch
      %14 = sbr.rel (0) target = $region5
    $region4: #{tpu_custom_call.1} parent=1 // pred_region
      %s16 = ssub.s32 256, 256
      %17 = vsyncadd [#allocation4], %s16
      %s18 = sshll.u32 [#allocation3], 4
      %s19 = int_to_ptr.vmem [resolvable:$true] %s18
      %24 = dma.hbm_to_vmem [thread:$0]  %s0, 256, %s19, [#allocation4], 128, 128, 8
    $region5: #{tpu_custom_call.1} parent=1 // pred_fallthru
      _
    // Predicated region
    $region6: #{tpu_custom_call.1} parent=1 // pred_check
      _
    $region7: #{tpu_custom_call.1} parent=1 // pred_check_branch
      %26 = sbr.rel (0) target = $region9
    $region8: #{tpu_custom_call.1} parent=1 // pred_region
      %s28 = ssub.s32 4096, 4096
      %29 = vsyncadd [#allocation7], %s28
      %s30 = sshll.u32 [#allocation6], 4
      %s31 = int_to_ptr.vmem [resolvable:$true] %s30
      %36 = dma.hbm_to_vmem [thread:$0]  %s1, 4096, %s31, [#allocation7], 256, 256, 16
    $region9: #{tpu_custom_call.1} parent=1 // pred_fallthru
      _
    // Predicated region
    $region10: #{tpu_custom_call.1} parent=1 // pred_check
      _
    $region11: #{tpu_custom_call.1} parent=1 // pred_check_branch
      %38 = sbr.rel (0) target = $region13
    $region12: #{tpu_custom_call.1} parent=1 // pred_region
      _
    $region13: #{tpu_custom_call.1} parent=1 // pred_fallthru
      _
    // Predicated region
    $region14: #{tpu_custom_call.1} parent=1 // pred_check
      _
    $region15: #{tpu_custom_call.1} parent=1 // pred_check_branch
      %40 = sbr.rel (0) target = $region17
    $region16: #{tpu_custom_call.1} parent=1 // pred_region
      %s42 = ssub.s32 2048, 2048
      %43 = vsyncadd [#allocation7], %s42
      %s44 = sshll.u32 [#allocation8], 4
      %s45 = int_to_ptr.vmem [resolvable:$true] %s44
      %50 = dma.hbm_to_vmem [thread:$0]  %s3, 2048, %s45, [#allocation7], 128, 128, 8
    $region17: #{tpu_custom_call.1} parent=1 // pred_fallthru
      _
    // Predicated region
    $region18: #{tpu_custom_call.1} parent=1 // pred_check
      _
    $region19: #{tpu_custom_call.1} parent=1 // pred_check_branch
      %52 = sbr.rel (0) target = $region21
    $region20: #{tpu_custom_call.1} parent=1 // pred_region
      _
    $region21: #{tpu_custom_call.1} parent=1 // pred_fallthru
      _
    // Predicated region
    $region22: #{tpu_custom_call.1} parent=1 // pred_check
      _
    $region23: #{tpu_custom_call.1} parent=1 // pred_check_branch
      %54 = sbr.rel (0) target = $region25
    $region24: #{tpu_custom_call.1} parent=1 // pred_region
      %55 = dma.done [#allocation4], 256
    $region25: #{tpu_custom_call.1} parent=1 // pred_fallthru
      _
    // Predicated region
    $region26: #{tpu_custom_call.1} parent=1 // pred_check
      _
    $region27: #{tpu_custom_call.1} parent=1 // pred_check_branch
      %57 = sbr.rel (0) target = $region29
    $region28: #{tpu_custom_call.1} parent=1 // pred_region
      %58 = dma.done [#allocation7], 4096
    $region29: #{tpu_custom_call.1} parent=1 // pred_fallthru
      _
    // Predicated region
    $region30: #{tpu_custom_call.1} parent=1 // pred_check
      _
    $region31: #{tpu_custom_call.1} parent=1 // pred_check_branch
      %60 = sbr.rel (0) target = $region33
    $region32: #{tpu_custom_call.1} parent=1 // pred_region
      %61 = dma.done [#allocation7], 2048
    $region33: #{tpu_custom_call.1} parent=1 // pred_fallthru
      _
    %v62 = vld [vmem:[#allocation3] sm:$0xff]
    %v63 = vld [vmem:[#allocation3 + $0x8] sm:$0xff]
    %v64 = vld [vmem:[#allocation6] sm:$0xff]
    %v65 = vld [vmem:[#allocation6 + $0x8] sm:$0xff]
    %v66 = vld [vmem:[#allocation6 + $0x10] sm:$0xff]
    %v67 = vld [vmem:[#allocation6 + $0x18] sm:$0xff]
    %v68 = vld [vmem:[#allocation6 + $0x20] sm:$0xff]
    %v69 = vld [vmem:[#allocation6 + $0x28] sm:$0xff]
    %v70 = vld [vmem:[#allocation6 + $0x30] sm:$0xff]
    %v71 = vld [vmem:[#allocation6 + $0x38] sm:$0xff]
    %v72 = vld [vmem:[#allocation6 + $0x40] sm:$0xff]
    %v73 = vld [vmem:[#allocation6 + $0x48] sm:$0xff]
    %v74 = vld [vmem:[#allocation6 + $0x50] sm:$0xff]
    %v75 = vld [vmem:[#allocation6 + $0x58] sm:$0xff]
    %v76 = vld [vmem:[#allocation6 + $0x60] sm:$0xff]
    %v77 = vld [vmem:[#allocation6 + $0x68] sm:$0xff]
    %v78 = vld [vmem:[#allocation6 + $0x70] sm:$0xff]
    %v79 = vld [vmem:[#allocation6 + $0x78] sm:$0xff]
    %v80 = vld [vmem:[#allocation6 + $0x80] sm:$0xff]
    %v81 = vld [vmem:[#allocation6 + $0x88] sm:$0xff]
    %v82 = vld [vmem:[#allocation6 + $0x90] sm:$0xff]
    %v83 = vld [vmem:[#allocation6 + $0x98] sm:$0xff]
    %v84 = vld [vmem:[#allocation6 + $0xa0] sm:$0xff]
    %v85 = vld [vmem:[#allocation6 + $0xa8] sm:$0xff]
    %v86 = vld [vmem:[#allocation6 + $0xb0] sm:$0xff]
    %v87 = vld [vmem:[#allocation6 + $0xb8] sm:$0xff]
    %v88 = vld [vmem:[#allocation6 + $0xc0] sm:$0xff]
    %v89 = vld [vmem:[#allocation6 + $0xc8] sm:$0xff]
    %v90 = vld [vmem:[#allocation6 + $0xd0] sm:$0xff]
    %v91 = vld [vmem:[#allocation6 + $0xd8] sm:$0xff]
    %v92 = vld [vmem:[#allocation6 + $0xe0] sm:$0xff]
    %v93 = vld [vmem:[#allocation6 + $0xe8] sm:$0xff]
    %v94 = vld [vmem:[#allocation6 + $0xf0] sm:$0xff]
    %v95 = vld [vmem:[#allocation6 + $0xf8] sm:$0xff]
    %v96 = vld [vmem:[%s2] sm:$0x3]
    %v98 = vlaneseq
    %v99 = vshrl.u32 %v98, 7
    %v100 = vsub.s32 0, %v99
    %v101 = vrot.slane %v96, %v100
    %v102 = vlaneseq
    %v103 = vshrl.u32 %v102, 7
    %v104 = vsub.s32 1, %v103
    %v105 = vrot.slane %v96, %v104
    %108 = vmatprep.subr.mxu0 %v65
    %109 = vmatpush1.msra.mxu0 %v64
    %110 = vmatprep.subr.mxu0 %v67
    %111 = vmatpush1.msra.mxu0 %v66
    %112 = vmatprep.subr.mxu0 %v69
    %113 = vmatpush1.msra.mxu0 %v68
    %114 = vmatprep.subr.mxu0 %v71
    %115 = vmatpush1.msra.mxu0 %v70
    %116 = vmatprep.subr.mxu0 %v73
    %117 = vmatpush1.msra.mxu0 %v72
    %118 = vmatprep.subr.mxu0 %v75
    %119 = vmatpush1.msra.mxu0 %v74
    %120 = vmatprep.subr.mxu0 %v77
    %121 = vmatpush1.msra.mxu0 %v76
    %122 = vmatprep.subr.mxu0 %v79
    %123 = vmatpush1.msra.mxu0 %v78
    %124 = vmatprep.subr.mxu0 %v81
    %125 = vmatpush1.msra.mxu0 %v80
    %126 = vmatprep.subr.mxu0 %v83
    %127 = vmatpush1.msra.mxu0 %v82
    %128 = vmatprep.subr.mxu0 %v85
    %129 = vmatpush1.msra.mxu0 %v84
    %130 = vmatprep.subr.mxu0 %v87
    %131 = vmatpush1.msra.mxu0 %v86
    %132 = vmatprep.subr.mxu0 %v89
    %133 = vmatpush1.msra.mxu0 %v88
    %134 = vmatprep.subr.mxu0 %v91
    %135 = vmatpush1.msra.mxu0 %v90
    %136 = vmatprep.subr.mxu0 %v93
    %137 = vmatpush1.msra.mxu0 %v92
    %138 = vmatprep.subr.mxu0 %v95
    %139 = vmatpush1.msra.mxu0 %v94
    %140 = vmatprep.subr.mxu0 0.0
    %141 = vmatpush1.msra.mxu0 0.0
    %142 = vmatprep.subr.mxu0 0.0
    %143 = vmatpush1.msra.mxu0 0.0
    %144 = vmatprep.subr.mxu0 0.0
    %145 = vmatpush1.msra.mxu0 0.0
    %146 = vmatprep.subr.mxu0 0.0
    %147 = vmatpush1.msra.mxu0 0.0
    %148 = vmatprep.subr.mxu0 0.0
    %149 = vmatpush1.msra.mxu0 0.0
    %150 = vmatprep.subr.mxu0 0.0
    %151 = vmatpush1.msra.mxu0 0.0
    %152 = vmatprep.subr.mxu0 0.0
    %153 = vmatpush1.msra.mxu0 0.0
    %154 = vmatprep.subr.mxu0 0.0
    %155 = vmatpush1.msra.mxu0 0.0
    %156 = vmatprep.subr.mxu0 0.0
    %157 = vmatpush1.msra.mxu0 0.0
    %158 = vmatprep.subr.mxu0 0.0
    %159 = vmatpush1.msra.mxu0 0.0
    %160 = vmatprep.subr.mxu0 0.0
    %161 = vmatpush1.msra.mxu0 0.0
    %162 = vmatprep.subr.mxu0 0.0
    %163 = vmatpush1.msra.mxu0 0.0
    %164 = vmatprep.subr.mxu0 0.0
    %165 = vmatpush1.msra.mxu0 0.0
    %166 = vmatprep.subr.mxu0 0.0
    %167 = vmatpush1.msra.mxu0 0.0
    %168 = vmatprep.subr.mxu0 0.0
    %169 = vmatpush1.msra.mxu0 0.0
    %170 = vmatprep.subr.mxu0 0.0
    %171 = vmatpush1.msra.mxu0 0.0
    %172 = vmatprep.mubr.f32.mxu0 0.0
    %173 = vmatmul.mubr.f32.gmra.mrb[0].mxu0 %v62
    %v174 = vpop.f32.mrb[0].mxu0
    %v175 = vadd.f32 %v101, %v174
    %v176 = vpop.f32.mrb[0].mxu0
    %v177 = vadd.f32 %v105, %v176
    %178 = vmatprep.mubr.f32.mxu0 0.0
    %179 = vmatmul.mubr.f32.gmra.mrb[0].mxu0 %v63
    %v180 = vpop.f32.mrb[0].mxu0
    %v181 = vadd.f32 %v101, %v180
    %v182 = vpop.f32.mrb[0].mxu0
    %v183 = vadd.f32 %v105, %v182
    %184 = vdwg.mxu0
    %v185 = vxor.u32 %v177, 2147483648
    %v186 = vxor.u32 %v183, 2147483648
    %v187 = vmul.f32 %v185, 1.442695
    %v188 = vpow.pop %v187
    %v189 = vmul.f32 %v186, 1.442695
    %v190 = vpow.pop %v189
    %v191 = vadd.f32 %v188, 1.0
    %v192 = vadd.f32 %v190, 1.0
    %v193 = vrcp.pop %v191
    %v194 = vmul.f32 1.0, %v193
    %v195 = vrcp.pop %v192
    %v196 = vmul.f32 1.0, %v195
    %v197 = vmul.f32 %v175, %v194
    %v198 = vmul.f32 %v181, %v196
    %v199 = vld [vmem:[#allocation8] sm:$0xff]
    %v200 = vld [vmem:[#allocation8 + $0x8] sm:$0xff]
    %v201 = vld [vmem:[#allocation8 + $0x10] sm:$0xff]
    %v202 = vld [vmem:[#allocation8 + $0x18] sm:$0xff]
    %v203 = vld [vmem:[#allocation8 + $0x20] sm:$0xff]
    %v204 = vld [vmem:[#allocation8 + $0x28] sm:$0xff]
    %v205 = vld [vmem:[#allocation8 + $0x30] sm:$0xff]
    %v206 = vld [vmem:[#allocation8 + $0x38] sm:$0xff]
    %v207 = vld [vmem:[#allocation8 + $0x40] sm:$0xff]
    %v208 = vld [vmem:[#allocation8 + $0x48] sm:$0xff]
    %v209 = vld [vmem:[#allocation8 + $0x50] sm:$0xff]
    %v210 = vld [vmem:[#allocation8 + $0x58] sm:$0xff]
    %v211 = vld [vmem:[#allocation8 + $0x60] sm:$0xff]
    %v212 = vld [vmem:[#allocation8 + $0x68] sm:$0xff]
    %v213 = vld [vmem:[#allocation8 + $0x70] sm:$0xff]
    %v214 = vld [vmem:[#allocation8 + $0x78] sm:$0xff]
    %215 = vmatprep.subr.mxu0 0.0
    %216 = vmatpush1.msra.mxu0 %v199
    %217 = vmatprep.subr.mxu0 0.0
    %218 = vmatpush1.msra.mxu0 %v200
    %219 = vmatprep.subr.mxu0 0.0
    %220 = vmatpush1.msra.mxu0 %v201
    %221 = vmatprep.subr.mxu0 0.0
    %222 = vmatpush1.msra.mxu0 %v202
    %223 = vmatprep.subr.mxu0 0.0
    %224 = vmatpush1.msra.mxu0 %v203
    %225 = vmatprep.subr.mxu0 0.0
    %226 = vmatpush1.msra.mxu0 %v204
    %227 = vmatprep.subr.mxu0 0.0
    %228 = vmatpush1.msra.mxu0 %v205
    %229 = vmatprep.subr.mxu0 0.0
    %230 = vmatpush1.msra.mxu0 %v206
    %231 = vmatprep.subr.mxu0 0.0
    %232 = vmatpush1.msra.mxu0 %v207
    %233 = vmatprep.subr.mxu0 0.0
    %234 = vmatpush1.msra.mxu0 %v208
    %235 = vmatprep.subr.mxu0 0.0
    %236 = vmatpush1.msra.mxu0 %v209
    %237 = vmatprep.subr.mxu0 0.0
    %238 = vmatpush1.msra.mxu0 %v210
    %239 = vmatprep.subr.mxu0 0.0
    %240 = vmatpush1.msra.mxu0 %v211
    %241 = vmatprep.subr.mxu0 0.0
    %242 = vmatpush1.msra.mxu0 %v212
    %243 = vmatprep.subr.mxu0 0.0
    %244 = vmatpush1.msra.mxu0 %v213
    %245 = vmatprep.subr.mxu0 0.0
    %246 = vmatpush1.msra.mxu0 %v214
    %247 = vmatprep.subr.mxu0 0.0
    %248 = vmatpush1.msra.mxu0 0.0
    %249 = vmatprep.subr.mxu0 0.0
    %250 = vmatpush1.msra.mxu0 0.0
    %251 = vmatprep.subr.mxu0 0.0
    %252 = vmatpush1.msra.mxu0 0.0
    %253 = vmatprep.subr.mxu0 0.0
    %254 = vmatpush1.msra.mxu0 0.0
    %255 = vmatprep.subr.mxu0 0.0
    %256 = vmatpush1.msra.mxu0 0.0
    %257 = vmatprep.subr.mxu0 0.0
    %258 = vmatpush1.msra.mxu0 0.0
    %259 = vmatprep.subr.mxu0 0.0
    %260 = vmatpush1.msra.mxu0 0.0
    %261 = vmatprep.subr.mxu0 0.0
    %262 = vmatpush1.msra.mxu0 0.0
    %263 = vmatprep.subr.mxu0 0.0
    %264 = vmatpush1.msra.mxu0 0.0
    %265 = vmatprep.subr.mxu0 0.0
    %266 = vmatpush1.msra.mxu0 0.0
    %267 = vmatprep.subr.mxu0 0.0
    %268 = vmatpush1.msra.mxu0 0.0
    %269 = vmatprep.subr.mxu0 0.0
    %270 = vmatpush1.msra.mxu0 0.0
    %271 = vmatprep.subr.mxu0 0.0
    %272 = vmatpush1.msra.mxu0 0.0
    %273 = vmatprep.subr.mxu0 0.0
    %274 = vmatpush1.msra.mxu0 0.0
    %275 = vmatprep.subr.mxu0 0.0
    %276 = vmatpush1.msra.mxu0 0.0
    %277 = vmatprep.subr.mxu0 0.0
    %278 = vmatpush1.msra.mxu0 0.0
    %279 = vmatprep.mubr.f32.mxu0 0.0
    %280 = vmatmul.mubr.f32.gmra.mrb[0].mxu0 %v197
    %v281 = vpop.f32.mrb[0].mxu0
    %v282 = vadd.f32 0.0, %v281
    %v283 = vpop.f32.mrb[0].mxu0
    %284 = vmatprep.mubr.f32.mxu0 0.0
    %285 = vmatmul.mubr.f32.gmra.mrb[0].mxu0 %v198
    %v286 = vpop.f32.mrb[0].mxu0
    %v287 = vadd.f32 0.0, %v286
    %v288 = vpop.f32.mrb[0].mxu0
    %289 = vdwg.mxu0
    %p290 = scmp.eq.s32.totalorder 0, 0
    // Predicated region
    $region34: #{tpu_custom_call.1} parent=1 // pred_check
      %p291 = pneg %p290
    $region35: #{tpu_custom_call.1} parent=1 // pred_check_branch
      %293 = sbr.rel (%p291) target = $region37
    $region36: #{tpu_custom_call.1} parent=1 // pred_region
      %v294 = vld [vmem:[%s4] sm:$0x1]
      %v296 = vlaneseq
      %v297 = vshrl.u32 %v296, 7
      %v298 = vsub.s32 0, %v297
      %v299 = vrot.slane %v294, %v298
      %v301 = vadd.f32 %v282, %v299
      %v302 = vadd.f32 %v287, %v299
      %303 = vst [vmem:[#allocation2] sm:$0xff] %v301
      %304 = vst [vmem:[#allocation2 + $0x8] sm:$0xff] %v302
    $region37: #{tpu_custom_call.1} parent=1 // pred_fallthru
      _
    %p305 = scmp.gt.s32.totalorder 0, 0
    // Predicated region
    $region38: #{tpu_custom_call.1} parent=1 // pred_check
      %p306 = pneg %p305
    $region39: #{tpu_custom_call.1} parent=1 // pred_check_branch
      %308 = sbr.rel (%p306) target = $region41
    $region40: #{tpu_custom_call.1} parent=1 // pred_region
      %v309 = vld [vmem:[#allocation2] sm:$0xff]
      %v310 = vld [vmem:[#allocation2 + $0x8] sm:$0xff]
      %v311 = vadd.f32 %v309, %v282
      %v312 = vadd.f32 %v310, %v287
      %313 = vst [vmem:[#allocation2] sm:$0xff] %v311
      %314 = vst [vmem:[#allocation2 + $0x8] sm:$0xff] %v312
    $region41: #{tpu_custom_call.1} parent=1 // pred_fallthru
      _
    // Predicated region
    $region42: #{tpu_custom_call.1} parent=1 // pred_check
      %p315 = pneg %p290
    $region43: #{tpu_custom_call.1} parent=1 // pred_check_branch
      %317 = sbr.rel (%p315) target = $region45
    $region44: #{tpu_custom_call.1} parent=1 // pred_region
      %v318 = vld [vmem:[#allocation2] sm:$0xff]
      %v319 = vld [vmem:[#allocation2 + $0x8] sm:$0xff]
      %320 = vst [vmem:[#allocation9] sm:$0xff] %v318
      %321 = vst [vmem:[#allocation9 + $0x8] sm:$0xff] %v319
    $region45: #{tpu_custom_call.1} parent=1 // pred_fallthru
      _
    // Predicated region
    $region46: #{tpu_custom_call.1} parent=1 // pred_check
      _
    $region47: #{tpu_custom_call.1} parent=1 // pred_check_branch
      %323 = sbr.rel (0) target = $region49
    $region48: #{tpu_custom_call.1} parent=1 // pred_region
      %s325 = ssub.s32 256, 256
      %326 = vsyncadd [#allocation5], %s325
      %s327 = sshll.u32 [#allocation9], 4
      %s328 = int_to_ptr.vmem [resolvable:$true] %s327
      %333 = dma.vmem_to_hbm [thread:$0]  %s328, 256, %s5, [#allocation5], 128, 128, 8
    $region49: #{tpu_custom_call.1} parent=1 // pred_fallthru
      _
    // Predicated region
    $region50: #{tpu_custom_call.1} parent=1 // pred_check
      _
    $region51: #{tpu_custom_call.1} parent=1 // pred_check_branch
      %335 = sbr.rel (0) target = $region53
    $region52: #{tpu_custom_call.1} parent=1 // pred_region
      %336 = dma.done [#allocation5], 256
    $region53: #{tpu_custom_call.1} parent=1 // pred_fallthru
      _
    %337 = vsyncpa [#allocation4], 1
    %338 = vsyncpa [#allocation7], 1
    %339 = vsyncpa [#allocation5], 1

</llo_original>
